<compile_context>
chip_gen: v6e
topology: v6e:2x2x1
jax: 0.10.0
libtpu: 0.0.40
codegen_flags: <defaults>
</compile_context>

<pallas_src>
import jax
import jax.numpy as jnp
from jax.experimental import pallas as pl
from jax.experimental.pallas import tpu as pltpu

NEG_SLOPE = 0.01  # PyTorch LeakyReLU default


def _leaky_relu(x):
    # max(x, 0.01*x) == LeakyReLU(x) for slope in (0, 1).
    return jnp.maximum(x, NEG_SLOPE * x)


def _round_up(n, m):
    return (n + m - 1) // m * m


def _choose_batch_tile(B, max_tile=512):
    """Large tiles for MXU cadence; keep >=2 grid steps when batch allows
    so the 'parallel' batch axis can shard across both v7x TensorCores."""
    Bp = _round_up(max(B, 8), 8)
    if Bp >= 2 * max_tile:
        return max_tile                      # full-size tiles, grid >= 2
    if Bp >= 128:
        return _round_up((Bp + 1) // 2, 8)   # split into two tiles
    return Bp                                # tiny batch: single tile


def dislayer_kernel(x_ref,
                    w1, b1, w2, b2, w3, b3, w4, b4, w5, b5, w6, b6, w7, b7,
                    o_ref):
    """Fused 7-layer MLP. Weights (bf16) / biases (f32) resident in VMEM."""
    def lin(h, w_ref, b_ref):
        # bf16 x bf16 operands, f32 accumulation on the MXU.
        return jnp.dot(h.astype(jnp.bfloat16), w_ref[...],
                       preferred_element_type=jnp.float32) + b_ref[...]

    h = x_ref[...].astype(jnp.float32)
    h = _leaky_relu(lin(h, w1, b1))
    h = _leaky_relu(lin(h, w2, b2))
    h = _leaky_relu(lin(h, w3, b3))
    h = _leaky_relu(lin(h, w4, b4))
    h = _leaky_relu(lin(h, w5, b5))
    h = _leaky_relu(lin(h, w6, b6))
    o_ref[...] = lin(h, w7, b7).astype(o_ref.dtype)


def init_dislayer_params(key, input_planes, output_planes):
    """Deterministic init matching nn.Linear shapes (uniform ±1/sqrt(fan_in)).

    Returns list of (W, b) with W of shape (fan_in, fan_out), f32."""
    dims = [input_planes, 100, 100, 200, 200, 100, 100, output_planes]
    params = []
    for i in range(7):
        fan_in, fan_out = dims[i], dims[i + 1]
        key, kw, kb = jax.random.split(key, 3)
        bound = 1.0 / jnp.sqrt(jnp.float32(fan_in))
        w = jax.random.uniform(kw, (fan_in, fan_out), jnp.float32, -bound, bound)
        b = jax.random.uniform(kb, (fan_out,), jnp.float32, -bound, bound)
        params.append((w, b))
    return params


def prepare_dislayer_params(params):
    """One-time padding/casting of parameters (do NOT repeat per forward call).

    Weights -> bf16, zero-padded to 128-lane multiples; biases -> f32 rows."""
    dims = [params[0][0].shape[0]] + [w.shape[1] for (w, _) in params]
    pdims = [_round_up(d, 128) for d in dims]
    flat = []
    for i, (w, b) in enumerate(params):
        wp = jnp.zeros((pdims[i], pdims[i + 1]), jnp.bfloat16)
        wp = wp.at[:w.shape[0], :w.shape[1]].set(w.astype(jnp.bfloat16))
        bp = jnp.zeros((1, pdims[i + 1]), jnp.float32)
        bp = bp.at[0, :b.shape[0]].set(b.astype(jnp.float32))
        flat += [wp, bp]
    return {"flat": tuple(flat), "dims": tuple(dims), "pdims": tuple(pdims)}


def dislayer_forward(x, prepared, *, max_batch_tile=512):
    """x: (B, input_planes) float32 -> (B, output_planes) float32."""
    dims, pdims = prepared["dims"], prepared["pdims"]
    B, d_in = x.shape
    assert d_in == dims[0], (d_in, dims[0])
    d_out = dims[-1]

    tile = _choose_batch_tile(B, max_batch_tile)
    Bp = _round_up(max(B, tile), tile)

    x_p = jnp.zeros((Bp, pdims[0]), jnp.float32).at[:B, :d_in].set(
        x.astype(jnp.float32))

    full = lambda i: (0, 0)
    in_specs = [pl.BlockSpec((tile, pdims[0]), lambda i: (i, 0))]
    for i in range(7):
        in_specs.append(pl.BlockSpec((pdims[i], pdims[i + 1]), full))   # W_i
        in_specs.append(pl.BlockSpec((1, pdims[i + 1]), full))          # b_i
    out_spec = pl.BlockSpec((tile, pdims[-1]), lambda i: (i, 0))

    # Advisory cost estimate for XLA's scheduler around the custom call.
    flops = 2 * Bp * sum(pdims[i] * pdims[i + 1] for i in range(7))
    w_bytes = sum(pdims[i] * pdims[i + 1] * 2 + pdims[i + 1] * 4
                  for i in range(7))
    bytes_accessed = w_bytes + Bp * (pdims[0] + pdims[-1]) * 4

    out_p = pl.pallas_call(
        dislayer_kernel,
        out_shape=jax.ShapeDtypeStruct((Bp, pdims[-1]), jnp.float32),
        grid_spec=pltpu.PrefetchScalarGridSpec(
            num_scalar_prefetch=0,
            grid=(Bp // tile,),
            in_specs=in_specs,
            out_specs=out_spec,
        ),
        compiler_params=pltpu.CompilerParams(
            dimension_semantics=("parallel",),
            vmem_limit_bytes=32 * 1024 * 1024,
        ),
        cost_estimate=pl.CostEstimate(
            flops=flops, transcendentals=0, bytes_accessed=bytes_accessed),
    )(x_p, *prepared["flat"])

    return out_p[:B, :d_out]


def dislayer_reference_f32(x, params):
    """PyTorch-semantics forward in pure f32."""
    h = x
    for i, (w, b) in enumerate(params):
        h = h @ w + b
        if i < 6:
            h = jnp.maximum(h, NEG_SLOPE * h)
    return h


def dislayer_reference_bf16(x, params):
    """Mirrors the kernel numerics: bf16 operands, f32 accumulation."""
    h = x.astype(jnp.float32)
    for i, (w, b) in enumerate(params):
        h = jnp.dot(h.astype(jnp.bfloat16), w.astype(jnp.bfloat16),
                    preferred_element_type=jnp.float32) + b
        if i < 6:
            h = jnp.maximum(h, NEG_SLOPE * h)
    return h


if __name__ == "__main__":
    key = jax.random.PRNGKey(0)
    k_param, k_x = jax.random.split(key)

    input_planes, output_planes = 32, 16
    B = 2
    params = init_dislayer_params(k_param, input_planes, output_planes)
    prepared = prepare_dislayer_params(params)   # one-time padding/cast
    x = jax.random.normal(k_x, (B, input_planes), jnp.float32)

    out = dislayer_forward(x, prepared)
    out = jax.block_until_ready(out)

    assert out.shape == (B, output_planes), out.shape

    # Tight check against a reference that uses the same bf16-operand /
    # f32-accumulation numerics as the kernel.
    ref_bf16 = dislayer_reference_bf16(x, params)
    assert jnp.allclose(out, ref_bf16, atol=1e-2, rtol=1e-2), \
        "mismatch vs bf16-path reference"

    # Loose sanity check against the full-f32 (PyTorch-semantics) reference;
    # bf16 operands keep the deviation at the ~1% level for this MLP.
    ref_f32 = dislayer_reference_f32(x, params)
    assert jnp.allclose(out, ref_f32, atol=1e-1, rtol=1e-1), \
        "mismatch vs f32 reference"

    print("KERNEL_OK")
</pallas_src>

<mosaic_0001>
module attributes {stable_mosaic.version = 11 : i64} {
  func.func @dislayer_kernel(%arg0: i32, %arg1: memref<8x128xf32, #tpu.memory_space<vmem>>, %arg2: memref<128x128xbf16, #tpu.memory_space<vmem>>, %arg3: memref<1x128xf32, #tpu.memory_space<vmem>>, %arg4: memref<128x128xbf16, #tpu.memory_space<vmem>>, %arg5: memref<1x128xf32, #tpu.memory_space<vmem>>, %arg6: memref<128x256xbf16, #tpu.memory_space<vmem>>, %arg7: memref<1x256xf32, #tpu.memory_space<vmem>>, %arg8: memref<256x256xbf16, #tpu.memory_space<vmem>>, %arg9: memref<1x256xf32, #tpu.memory_space<vmem>>, %arg10: memref<256x128xbf16, #tpu.memory_space<vmem>>, %arg11: memref<1x128xf32, #tpu.memory_space<vmem>>, %arg12: memref<128x128xbf16, #tpu.memory_space<vmem>>, %arg13: memref<1x128xf32, #tpu.memory_space<vmem>>, %arg14: memref<128x128xbf16, #tpu.memory_space<vmem>>, %arg15: memref<1x128xf32, #tpu.memory_space<vmem>>, %arg16: memref<8x128xf32, #tpu.memory_space<vmem>>) attributes {dimension_semantics = [#tpu.dimension_semantics<parallel>], iteration_bounds = array<i64: 1>, scalar_prefetch = 0 : i64, scratch_operands = 0 : i64, tpu.core_type = #tpu.core_type<tc>, window_params = [{transform_indices = @transform_0, window_bounds = array<i64: 8, 128>}, {pipeline_mode = #tpu.pipeline_mode<synchronous>, transform_indices = @transform_1, window_bounds = array<i64: 128, 128>}, {pipeline_mode = #tpu.pipeline_mode<synchronous>, transform_indices = @transform_2, window_bounds = array<i64: 1, 128>}, {pipeline_mode = #tpu.pipeline_mode<synchronous>, transform_indices = @transform_3, window_bounds = array<i64: 128, 128>}, {pipeline_mode = #tpu.pipeline_mode<synchronous>, transform_indices = @transform_4, window_bounds = array<i64: 1, 128>}, {pipeline_mode = #tpu.pipeline_mode<synchronous>, transform_indices = @transform_5, window_bounds = array<i64: 128, 256>}, {pipeline_mode = #tpu.pipeline_mode<synchronous>, transform_indices = @transform_6, window_bounds = array<i64: 1, 256>}, {pipeline_mode = #tpu.pipeline_mode<synchronous>, transform_indices = @transform_7, window_bounds = array<i64: 256, 256>}, {pipeline_mode = #tpu.pipeline_mode<synchronous>, transform_indices = @transform_8, window_bounds = array<i64: 1, 256>}, {pipeline_mode = #tpu.pipeline_mode<synchronous>, transform_indices = @transform_9, window_bounds = array<i64: 256, 128>}, {pipeline_mode = #tpu.pipeline_mode<synchronous>, transform_indices = @transform_10, window_bounds = array<i64: 1, 128>}, {pipeline_mode = #tpu.pipeline_mode<synchronous>, transform_indices = @transform_11, window_bounds = array<i64: 128, 128>}, {pipeline_mode = #tpu.pipeline_mode<synchronous>, transform_indices = @transform_12, window_bounds = array<i64: 1, 128>}, {pipeline_mode = #tpu.pipeline_mode<synchronous>, transform_indices = @transform_13, window_bounds = array<i64: 128, 128>}, {pipeline_mode = #tpu.pipeline_mode<synchronous>, transform_indices = @transform_14, window_bounds = array<i64: 1, 128>}, {transform_indices = @transform_15, window_bounds = array<i64: 8, 128>}]} {
    %c0 = arith.constant 0 : index
    %c0_0 = arith.constant 0 : index
    %0 = vector.load %arg1[%c0, %c0_0] : memref<8x128xf32, #tpu.memory_space<vmem>>, vector<8x128xf32>
    %1 = arith.truncf %0 : vector<8x128xf32> to vector<8x128xbf16>
    %c0_1 = arith.constant 0 : index
    %c0_2 = arith.constant 0 : index
    %2 = vector.load %arg2[%c0_1, %c0_2] : memref<128x128xbf16, #tpu.memory_space<vmem>>, vector<128x128xbf16>
    %cst = arith.constant dense<0.000000e+00> : vector<8x128xf32>
    %3 = tpu.matmul %1, %2, %cst {dimension_numbers = #tpu.dot_dimension_numbers<[1], [0], [0], [1], [0, 0, 1, 1], [], []>} : vector<8x128xbf16>, vector<128x128xbf16>, vector<8x128xf32> -> vector<8x128xf32>
    %c0_3 = arith.constant 0 : index
    %c0_4 = arith.constant 0 : index
    %4 = vector.load %arg3[%c0_3, %c0_4] : memref<1x128xf32, #tpu.memory_space<vmem>>, vector<1x128xf32>
    %5 = vector.broadcast %4 : vector<1x128xf32> to vector<8x128xf32>
    %6 = arith.addf %3, %5 : vector<8x128xf32>
    %cst_5 = arith.constant 0.00999999977 : f32
    %7 = vector.broadcast %cst_5 : f32 to vector<8x128xf32>
    %8 = arith.mulf %7, %6 : vector<8x128xf32>
    %9 = arith.maximumf %6, %8 : vector<8x128xf32>
    %10 = arith.truncf %9 : vector<8x128xf32> to vector<8x128xbf16>
    %c0_6 = arith.constant 0 : index
    %c0_7 = arith.constant 0 : index
    %11 = vector.load %arg4[%c0_6, %c0_7] : memref<128x128xbf16, #tpu.memory_space<vmem>>, vector<128x128xbf16>
    %cst_8 = arith.constant dense<0.000000e+00> : vector<8x128xf32>
    %12 = tpu.matmul %10, %11, %cst_8 {dimension_numbers = #tpu.dot_dimension_numbers<[1], [0], [0], [1], [0, 0, 1, 1], [], []>} : vector<8x128xbf16>, vector<128x128xbf16>, vector<8x128xf32> -> vector<8x128xf32>
    %c0_9 = arith.constant 0 : index
    %c0_10 = arith.constant 0 : index
    %13 = vector.load %arg5[%c0_9, %c0_10] : memref<1x128xf32, #tpu.memory_space<vmem>>, vector<1x128xf32>
    %14 = vector.broadcast %13 : vector<1x128xf32> to vector<8x128xf32>
    %15 = arith.addf %12, %14 : vector<8x128xf32>
    %cst_11 = arith.constant 0.00999999977 : f32
    %16 = vector.broadcast %cst_11 : f32 to vector<8x128xf32>
    %17 = arith.mulf %16, %15 : vector<8x128xf32>
    %18 = arith.maximumf %15, %17 : vector<8x128xf32>
    %19 = arith.truncf %18 : vector<8x128xf32> to vector<8x128xbf16>
    %c0_12 = arith.constant 0 : index
    %c0_13 = arith.constant 0 : index
    %20 = vector.load %arg6[%c0_12, %c0_13] : memref<128x256xbf16, #tpu.memory_space<vmem>>, vector<128x256xbf16>
    %cst_14 = arith.constant dense<0.000000e+00> : vector<8x256xf32>
    %21 = tpu.matmul %19, %20, %cst_14 {dimension_numbers = #tpu.dot_dimension_numbers<[1], [0], [0], [1], [0, 0, 1, 1], [], []>} : vector<8x128xbf16>, vector<128x256xbf16>, vector<8x256xf32> -> vector<8x256xf32>
    %c0_15 = arith.constant 0 : index
    %c0_16 = arith.constant 0 : index
    %22 = vector.load %arg7[%c0_15, %c0_16] : memref<1x256xf32, #tpu.memory_space<vmem>>, vector<1x256xf32>
    %23 = vector.broadcast %22 : vector<1x256xf32> to vector<8x256xf32>
    %24 = arith.addf %21, %23 : vector<8x256xf32>
    %cst_17 = arith.constant 0.00999999977 : f32
    %25 = vector.broadcast %cst_17 : f32 to vector<8x256xf32>
    %26 = arith.mulf %25, %24 : vector<8x256xf32>
    %27 = arith.maximumf %24, %26 : vector<8x256xf32>
    %28 = arith.truncf %27 : vector<8x256xf32> to vector<8x256xbf16>
    %c0_18 = arith.constant 0 : index
    %c0_19 = arith.constant 0 : index
    %29 = vector.load %arg8[%c0_18, %c0_19] : memref<256x256xbf16, #tpu.memory_space<vmem>>, vector<256x256xbf16>
    %cst_20 = arith.constant dense<0.000000e+00> : vector<8x256xf32>
    %30 = tpu.matmul %28, %29, %cst_20 {dimension_numbers = #tpu.dot_dimension_numbers<[1], [0], [0], [1], [0, 0, 1, 1], [], []>} : vector<8x256xbf16>, vector<256x256xbf16>, vector<8x256xf32> -> vector<8x256xf32>
    %c0_21 = arith.constant 0 : index
    %c0_22 = arith.constant 0 : index
    %31 = vector.load %arg9[%c0_21, %c0_22] : memref<1x256xf32, #tpu.memory_space<vmem>>, vector<1x256xf32>
    %32 = vector.broadcast %31 : vector<1x256xf32> to vector<8x256xf32>
    %33 = arith.addf %30, %32 : vector<8x256xf32>
    %cst_23 = arith.constant 0.00999999977 : f32
    %34 = vector.broadcast %cst_23 : f32 to vector<8x256xf32>
    %35 = arith.mulf %34, %33 : vector<8x256xf32>
    %36 = arith.maximumf %33, %35 : vector<8x256xf32>
    %37 = arith.truncf %36 : vector<8x256xf32> to vector<8x256xbf16>
    %c0_24 = arith.constant 0 : index
    %c0_25 = arith.constant 0 : index
    %38 = vector.load %arg10[%c0_24, %c0_25] : memref<256x128xbf16, #tpu.memory_space<vmem>>, vector<256x128xbf16>
    %cst_26 = arith.constant dense<0.000000e+00> : vector<8x128xf32>
    %39 = tpu.matmul %37, %38, %cst_26 {dimension_numbers = #tpu.dot_dimension_numbers<[1], [0], [0], [1], [0, 0, 1, 1], [], []>} : vector<8x256xbf16>, vector<256x128xbf16>, vector<8x128xf32> -> vector<8x128xf32>
    %c0_27 = arith.constant 0 : index
    %c0_28 = arith.constant 0 : index
    %40 = vector.load %arg11[%c0_27, %c0_28] : memref<1x128xf32, #tpu.memory_space<vmem>>, vector<1x128xf32>
    %41 = vector.broadcast %40 : vector<1x128xf32> to vector<8x128xf32>
    %42 = arith.addf %39, %41 : vector<8x128xf32>
    %cst_29 = arith.constant 0.00999999977 : f32
    %43 = vector.broadcast %cst_29 : f32 to vector<8x128xf32>
    %44 = arith.mulf %43, %42 : vector<8x128xf32>
    %45 = arith.maximumf %42, %44 : vector<8x128xf32>
    %46 = arith.truncf %45 : vector<8x128xf32> to vector<8x128xbf16>
    %c0_30 = arith.constant 0 : index
    %c0_31 = arith.constant 0 : index
    %47 = vector.load %arg12[%c0_30, %c0_31] : memref<128x128xbf16, #tpu.memory_space<vmem>>, vector<128x128xbf16>
    %cst_32 = arith.constant dense<0.000000e+00> : vector<8x128xf32>
    %48 = tpu.matmul %46, %47, %cst_32 {dimension_numbers = #tpu.dot_dimension_numbers<[1], [0], [0], [1], [0, 0, 1, 1], [], []>} : vector<8x128xbf16>, vector<128x128xbf16>, vector<8x128xf32> -> vector<8x128xf32>
    %c0_33 = arith.constant 0 : index
    %c0_34 = arith.constant 0 : index
    %49 = vector.load %arg13[%c0_33, %c0_34] : memref<1x128xf32, #tpu.memory_space<vmem>>, vector<1x128xf32>
    %50 = vector.broadcast %49 : vector<1x128xf32> to vector<8x128xf32>
    %51 = arith.addf %48, %50 : vector<8x128xf32>
    %cst_35 = arith.constant 0.00999999977 : f32
    %52 = vector.broadcast %cst_35 : f32 to vector<8x128xf32>
    %53 = arith.mulf %52, %51 : vector<8x128xf32>
    %54 = arith.maximumf %51, %53 : vector<8x128xf32>
    %55 = arith.truncf %54 : vector<8x128xf32> to vector<8x128xbf16>
    %c0_36 = arith.constant 0 : index
    %c0_37 = arith.constant 0 : index
    %56 = vector.load %arg14[%c0_36, %c0_37] : memref<128x128xbf16, #tpu.memory_space<vmem>>, vector<128x128xbf16>
    %cst_38 = arith.constant dense<0.000000e+00> : vector<8x128xf32>
    %57 = tpu.matmul %55, %56, %cst_38 {dimension_numbers = #tpu.dot_dimension_numbers<[1], [0], [0], [1], [0, 0, 1, 1], [], []>} : vector<8x128xbf16>, vector<128x128xbf16>, vector<8x128xf32> -> vector<8x128xf32>
    %c0_39 = arith.constant 0 : index
    %c0_40 = arith.constant 0 : index
    %58 = vector.load %arg15[%c0_39, %c0_40] : memref<1x128xf32, #tpu.memory_space<vmem>>, vector<1x128xf32>
    %59 = vector.broadcast %58 : vector<1x128xf32> to vector<8x128xf32>
    %60 = arith.addf %57, %59 : vector<8x128xf32>
    %c0_41 = arith.constant 0 : index
    %c0_42 = arith.constant 0 : index
    %61 = vector.load %arg16[%c0_41, %c0_42] : memref<8x128xf32, #tpu.memory_space<vmem>>, vector<8x128xf32>
    tpu.vector_store %arg16[%c0_41, %c0_42], %60 {strides = array<i32>} : memref<8x128xf32, #tpu.memory_space<vmem>>, vector<8x128xf32>,
    return
  }
  func.func @transform_0(%arg0: i32) -> (i32, i32) {
    %c0_i32 = arith.constant 0 : i32
    %c0_i32_0 = arith.constant 0 : i32
    return %arg0, %c0_i32 : i32, i32
  }
  func.func @transform_1(%arg0: i32) -> (i32, i32) {
    %c0_i32 = arith.constant 0 : i32
    %c0_i32_0 = arith.constant 0 : i32
    %c0_i32_1 = arith.constant 0 : i32
    return %c0_i32, %c0_i32_0 : i32, i32
  }
  func.func @transform_2(%arg0: i32) -> (i32, i32) {
    %c0_i32 = arith.constant 0 : i32
    %c0_i32_0 = arith.constant 0 : i32
    %c0_i32_1 = arith.constant 0 : i32
    return %c0_i32, %c0_i32_0 : i32, i32
  }
  func.func @transform_3(%arg0: i32) -> (i32, i32) {
    %c0_i32 = arith.constant 0 : i32
    %c0_i32_0 = arith.constant 0 : i32
    %c0_i32_1 = arith.constant 0 : i32
    return %c0_i32, %c0_i32_0 : i32, i32
  }
  func.func @transform_4(%arg0: i32) -> (i32, i32) {
    %c0_i32 = arith.constant 0 : i32
    %c0_i32_0 = arith.constant 0 : i32
    %c0_i32_1 = arith.constant 0 : i32
    return %c0_i32, %c0_i32_0 : i32, i32
  }
  func.func @transform_5(%arg0: i32) -> (i32, i32) {
    %c0_i32 = arith.constant 0 : i32
    %c0_i32_0 = arith.constant 0 : i32
    %c0_i32_1 = arith.constant 0 : i32
    return %c0_i32, %c0_i32_0 : i32, i32
  }
  func.func @transform_6(%arg0: i32) -> (i32, i32) {
    %c0_i32 = arith.constant 0 : i32
    %c0_i32_0 = arith.constant 0 : i32
    %c0_i32_1 = arith.constant 0 : i32
    return %c0_i32, %c0_i32_0 : i32, i32
  }
  func.func @transform_7(%arg0: i32) -> (i32, i32) {
    %c0_i32 = arith.constant 0 : i32
    %c0_i32_0 = arith.constant 0 : i32
    %c0_i32_1 = arith.constant 0 : i32
    return %c0_i32, %c0_i32_0 : i32, i32
  }
  func.func @transform_8(%arg0: i32) -> (i32, i32) {
    %c0_i32 = arith.constant 0 : i32
    %c0_i32_0 = arith.constant 0 : i32
    %c0_i32_1 = arith.constant 0 : i32
    return %c0_i32, %c0_i32_0 : i32, i32
  }
  func.func @transform_9(%arg0: i32) -> (i32, i32) {
    %c0_i32 = arith.constant 0 : i32
    %c0_i32_0 = arith.constant 0 : i32
    %c0_i32_1 = arith.constant 0 : i32
    return %c0_i32, %c0_i32_0 : i32, i32
  }
  func.func @transform_10(%arg0: i32) -> (i32, i32) {
    %c0_i32 = arith.constant 0 : i32
    %c0_i32_0 = arith.constant 0 : i32
    %c0_i32_1 = arith.constant 0 : i32
    return %c0_i32, %c0_i32_0 : i32, i32
  }
  func.func @transform_11(%arg0: i32) -> (i32, i32) {
    %c0_i32 = arith.constant 0 : i32
    %c0_i32_0 = arith.constant 0 : i32
    %c0_i32_1 = arith.constant 0 : i32
    return %c0_i32, %c0_i32_0 : i32, i32
  }
  func.func @transform_12(%arg0: i32) -> (i32, i32) {
    %c0_i32 = arith.constant 0 : i32
    %c0_i32_0 = arith.constant 0 : i32
    %c0_i32_1 = arith.constant 0 : i32
    return %c0_i32, %c0_i32_0 : i32, i32
  }
  func.func @transform_13(%arg0: i32) -> (i32, i32) {
    %c0_i32 = arith.constant 0 : i32
    %c0_i32_0 = arith.constant 0 : i32
    %c0_i32_1 = arith.constant 0 : i32
    return %c0_i32, %c0_i32_0 : i32, i32
  }
  func.func @transform_14(%arg0: i32) -> (i32, i32) {
    %c0_i32 = arith.constant 0 : i32
    %c0_i32_0 = arith.constant 0 : i32
    %c0_i32_1 = arith.constant 0 : i32
    return %c0_i32, %c0_i32_0 : i32, i32
  }
  func.func @transform_15(%arg0: i32) -> (i32, i32) {
    %c0_i32 = arith.constant 0 : i32
    %c0_i32_0 = arith.constant 0 : i32
    return %arg0, %c0_i32 : i32, i32
  }
}

</mosaic_0001>

<llo_original>
// kernel: tpu_custom_call.1
$region0: #{tpu_custom_call.1}
  #allocation0 [shape = 'u32[]', space=smem, size = 0x4, offset = 0x4, fixed_abs, tag = 'smem constant byte address 0x4 - core index']
  #allocation1 [shape = 'u32[144,128]{1,0:T(1,128)}', space=vmem, size = 0x12000, scoped, tag = 'internal scratch']
  %s0 = inlined_call_operand.hbm [shape: f32[8,128], index: 0, kind: input, shape index: {}]
  %s1 = inlined_call_operand.hbm [shape: bf16[128,128], index: 1, kind: input, shape index: {}]
  %s2 = inlined_call_operand.vmem [shape: f32[1,128], index: 2, kind: input, shape index: {}]
  %s3 = inlined_call_operand.hbm [shape: bf16[128,128], index: 3, kind: input, shape index: {}]
  %s4 = inlined_call_operand.vmem [shape: f32[1,128], index: 4, kind: input, shape index: {}]
  %s5 = inlined_call_operand.hbm [shape: bf16[128,256], index: 5, kind: input, shape index: {}]
  %s6 = inlined_call_operand.vmem [shape: f32[1,256], index: 6, kind: input, shape index: {}]
  %s7 = inlined_call_operand.hbm [shape: bf16[256,256], index: 7, kind: input, shape index: {}]
  %s8 = inlined_call_operand.vmem [shape: f32[1,256], index: 8, kind: input, shape index: {}]
  %s9 = inlined_call_operand.hbm [shape: bf16[256,128], index: 9, kind: input, shape index: {}]
  %s10 = inlined_call_operand.vmem [shape: f32[1,128], index: 10, kind: input, shape index: {}]
  %s11 = inlined_call_operand.hbm [shape: bf16[128,128], index: 11, kind: input, shape index: {}]
  %s12 = inlined_call_operand.vmem [shape: f32[1,128], index: 12, kind: input, shape index: {}]
  %s13 = inlined_call_operand.hbm [shape: bf16[128,128], index: 13, kind: input, shape index: {}]
  %s14 = inlined_call_operand.vmem [shape: f32[1,128], index: 14, kind: input, shape index: {}]
  %s15 = inlined_call_operand.hbm [shape: f32[8,128], index: 15, kind: output, shape index: {}]
  %s16 = sld [smem:[#allocation0]]
  $region102: #{tpu_custom_call.1} parent=0
    _
  %s18 = ssub.s32 1, %s16
  %s19 = scalar_select 0, %s18, %s16
  $region1: #{tpu_custom_call.1} parent=0
    #allocation2 [shape = 'u8[4096]{0}', space=vmem, size = 0x1000, scoped, tag = 'input window, operand 0, single buffered']
    #allocation3 [shape = 's32[1]{0}', space=sflag, size = 0x4, scoped, tag = 'scoped memory for tpu_custom_call.1']
    #allocation4 [shape = 's32[1]{0}', space=sflag, size = 0x4, scoped, tag = 'scoped memory for tpu_custom_call.1']
    #allocation5 [shape = 'u8[32768]{0}', space=vmem, size = 0x8000, scoped, tag = 'input window, operand 1, single buffered']
    #allocation6 [shape = 's32[1]{0}', space=sflag, size = 0x4, scoped, tag = 'scoped memory for tpu_custom_call.1']
    #allocation7 [shape = 'u8[32768]{0}', space=vmem, size = 0x8000, scoped, tag = 'input window, operand 3, single buffered']
    #allocation8 [shape = 'u8[65536]{0}', space=vmem, size = 0x10000, scoped, tag = 'input window, operand 5, single buffered']
    #allocation9 [shape = 's32[1]{0}', space=sflag, size = 0x4, scoped, tag = 'scoped memory for tpu_custom_call.1']
    #allocation10 [shape = 'u8[131072]{0}', space=vmem, size = 0x20000, scoped, tag = 'input window, operand 7, single buffered']
    #allocation11 [shape = 'u8[65536]{0}', space=vmem, size = 0x10000, scoped, tag = 'input window, operand 9, single buffered']
    #allocation12 [shape = 's32[1]{0}', space=sflag, size = 0x4, scoped, tag = 'scoped memory for tpu_custom_call.1']
    #allocation13 [shape = 'u8[32768]{0}', space=vmem, size = 0x8000, scoped, tag = 'input window, operand 11, single buffered']
    #allocation14 [shape = 'u8[32768]{0}', space=vmem, size = 0x8000, scoped, tag = 'input window, operand 13, single buffered']
    #allocation15 [shape = 's32[1]{0}', space=sflag, size = 0x4, scoped, tag = 'scoped memory for tpu_custom_call.1']
    #allocation16 [shape = 'u8[4096]{0}', space=vmem, size = 0x1000, scoped, tag = 'output window, operand 0, single buffered']
    %20 = vsyncpa [#allocation3], 0
    %21 = vsyncpa [#allocation6], 0
    %22 = vsyncpa [#allocation9], 0
    %23 = vsyncpa [#allocation12], 0
    %24 = vsyncpa [#allocation15], 0
    %25 = vsyncpa [#allocation4], 0
    // Predicated region
    $region2: #{tpu_custom_call.1} parent=1 // pred_check
      _
    $region3: #{tpu_custom_call.1} parent=1 // pred_check_branch
      %27 = sbr.rel (0) target = $region5
    $region4: #{tpu_custom_call.1} parent=1 // pred_region
      %s29 = ssub.s32 128, 128
      %30 = vsyncadd [#allocation3], %s29
      %s32 = sshll.u32 [#allocation2], 4
      %s33 = int_to_ptr.vmem [resolvable:$true] %s32
      %35 = dma.hbm_to_vmem [thread:$0]  %s0, 128, %s33, [#allocation3]
    $region5: #{tpu_custom_call.1} parent=1 // pred_fallthru
      _
    // Predicated region
    $region6: #{tpu_custom_call.1} parent=1 // pred_check
      _
    $region7: #{tpu_custom_call.1} parent=1 // pred_check_branch
      %37 = sbr.rel (0) target = $region9
    $region8: #{tpu_custom_call.1} parent=1 // pred_region
      %s39 = ssub.s32 1024, 1024
      %40 = vsyncadd [#allocation6], %s39
      %s41 = sshll.u32 [#allocation5], 4
      %s42 = int_to_ptr.vmem [resolvable:$true] %s41
      %47 = dma.hbm_to_vmem [thread:$0]  %s1, 1024, %s42, [#allocation6], 64, 64, 4
    $region9: #{tpu_custom_call.1} parent=1 // pred_fallthru
      _
    // Predicated region
    $region10: #{tpu_custom_call.1} parent=1 // pred_check
      _
    $region11: #{tpu_custom_call.1} parent=1 // pred_check_branch
      %49 = sbr.rel (0) target = $region13
    $region12: #{tpu_custom_call.1} parent=1 // pred_region
      _
    $region13: #{tpu_custom_call.1} parent=1 // pred_fallthru
      _
    // Predicated region
    $region14: #{tpu_custom_call.1} parent=1 // pred_check
      _
    $region15: #{tpu_custom_call.1} parent=1 // pred_check_branch
      %51 = sbr.rel (0) target = $region17
    $region16: #{tpu_custom_call.1} parent=1 // pred_region
      %s53 = ssub.s32 1024, 1024
      %54 = vsyncadd [#allocation6], %s53
      %s55 = sshll.u32 [#allocation7], 4
      %s56 = int_to_ptr.vmem [resolvable:$true] %s55
      %61 = dma.hbm_to_vmem [thread:$0]  %s3, 1024, %s56, [#allocation6], 64, 64, 4
    $region17: #{tpu_custom_call.1} parent=1 // pred_fallthru
      _
    // Predicated region
    $region18: #{tpu_custom_call.1} parent=1 // pred_check
      _
    $region19: #{tpu_custom_call.1} parent=1 // pred_check_branch
      %63 = sbr.rel (0) target = $region21
    $region20: #{tpu_custom_call.1} parent=1 // pred_region
      _
    $region21: #{tpu_custom_call.1} parent=1 // pred_fallthru
      _
    // Predicated region
    $region22: #{tpu_custom_call.1} parent=1 // pred_check
      _
    $region23: #{tpu_custom_call.1} parent=1 // pred_check_branch
      %65 = sbr.rel (0) target = $region25
    $region24: #{tpu_custom_call.1} parent=1 // pred_region
      %s67 = ssub.s32 2048, 2048
      %68 = vsyncadd [#allocation9], %s67
      %s69 = sshll.u32 [#allocation8], 4
      %s70 = int_to_ptr.vmem [resolvable:$true] %s69
      %75 = dma.hbm_to_vmem [thread:$0]  %s5, 2048, %s70, [#allocation9], 128, 128, 8
    $region25: #{tpu_custom_call.1} parent=1 // pred_fallthru
      _
    // Predicated region
    $region26: #{tpu_custom_call.1} parent=1 // pred_check
      _
    $region27: #{tpu_custom_call.1} parent=1 // pred_check_branch
      %77 = sbr.rel (0) target = $region29
    $region28: #{tpu_custom_call.1} parent=1 // pred_region
      _
    $region29: #{tpu_custom_call.1} parent=1 // pred_fallthru
      _
    // Predicated region
    $region30: #{tpu_custom_call.1} parent=1 // pred_check
      _
    $region31: #{tpu_custom_call.1} parent=1 // pred_check_branch
      %79 = sbr.rel (0) target = $region33
    $region32: #{tpu_custom_call.1} parent=1 // pred_region
      %s81 = ssub.s32 4096, 4096
      %82 = vsyncadd [#allocation9], %s81
      %s83 = sshll.u32 [#allocation10], 4
      %s84 = int_to_ptr.vmem [resolvable:$true] %s83
      %89 = dma.hbm_to_vmem [thread:$0]  %s7, 4096, %s84, [#allocation9], 128, 128, 8
    $region33: #{tpu_custom_call.1} parent=1 // pred_fallthru
      _
    // Predicated region
    $region34: #{tpu_custom_call.1} parent=1 // pred_check
      _
    $region35: #{tpu_custom_call.1} parent=1 // pred_check_branch
      %91 = sbr.rel (0) target = $region37
    $region36: #{tpu_custom_call.1} parent=1 // pred_region
      _
    $region37: #{tpu_custom_call.1} parent=1 // pred_fallthru
      _
    // Predicated region
    $region38: #{tpu_custom_call.1} parent=1 // pred_check
      _
    $region39: #{tpu_custom_call.1} parent=1 // pred_check_branch
      %93 = sbr.rel (0) target = $region41
    $region40: #{tpu_custom_call.1} parent=1 // pred_region
      %s95 = ssub.s32 2048, 2048
      %96 = vsyncadd [#allocation12], %s95
      %s97 = sshll.u32 [#allocation11], 4
      %s98 = int_to_ptr.vmem [resolvable:$true] %s97
      %103 = dma.hbm_to_vmem [thread:$0]  %s9, 2048, %s98, [#allocation12], 64, 64, 4
    $region41: #{tpu_custom_call.1} parent=1 // pred_fallthru
      _
    // Predicated region
    $region42: #{tpu_custom_call.1} parent=1 // pred_check
      _
    $region43: #{tpu_custom_call.1} parent=1 // pred_check_branch
      %105 = sbr.rel (0) target = $region45
    $region44: #{tpu_custom_call.1} parent=1 // pred_region
      _
    $region45: #{tpu_custom_call.1} parent=1 // pred_fallthru
      _
    // Predicated region
    $region46: #{tpu_custom_call.1} parent=1 // pred_check
      _
    $region47: #{tpu_custom_call.1} parent=1 // pred_check_branch
      %107 = sbr.rel (0) target = $region49
    $region48: #{tpu_custom_call.1} parent=1 // pred_region
      %s109 = ssub.s32 1024, 1024
      %110 = vsyncadd [#allocation12], %s109
      %s111 = sshll.u32 [#allocation13], 4
      %s112 = int_to_ptr.vmem [resolvable:$true] %s111
      %117 = dma.hbm_to_vmem [thread:$0]  %s11, 1024, %s112, [#allocation12], 64, 64, 4
    $region49: #{tpu_custom_call.1} parent=1 // pred_fallthru
      _
    // Predicated region
    $region50: #{tpu_custom_call.1} parent=1 // pred_check
      _
    $region51: #{tpu_custom_call.1} parent=1 // pred_check_branch
      %119 = sbr.rel (0) target = $region53
    $region52: #{tpu_custom_call.1} parent=1 // pred_region
      _
    $region53: #{tpu_custom_call.1} parent=1 // pred_fallthru
      _
    // Predicated region
    $region54: #{tpu_custom_call.1} parent=1 // pred_check
      _
    $region55: #{tpu_custom_call.1} parent=1 // pred_check_branch
      %121 = sbr.rel (0) target = $region57
    $region56: #{tpu_custom_call.1} parent=1 // pred_region
      %s123 = ssub.s32 1024, 1024
      %124 = vsyncadd [#allocation15], %s123
      %s125 = sshll.u32 [#allocation14], 4
      %s126 = int_to_ptr.vmem [resolvable:$true] %s125
      %131 = dma.hbm_to_vmem [thread:$0]  %s13, 1024, %s126, [#allocation15], 64, 64, 4
    $region57: #{tpu_custom_call.1} parent=1 // pred_fallthru
      _
    // Predicated region
    $region58: #{tpu_custom_call.1} parent=1 // pred_check
      _
    $region59: #{tpu_custom_call.1} parent=1 // pred_check_branch
      %133 = sbr.rel (0) target = $region61
    $region60: #{tpu_custom_call.1} parent=1 // pred_region
      _
    $region61: #{tpu_custom_call.1} parent=1 // pred_fallthru
      _
    // Predicated region
    $region62: #{tpu_custom_call.1} parent=1 // pred_check
      _
    $region63: #{tpu_custom_call.1} parent=1 // pred_check_branch
      %135 = sbr.rel (0) target = $region65
    $region64: #{tpu_custom_call.1} parent=1 // pred_region
      %136 = dma.done [#allocation3], 128
    $region65: #{tpu_custom_call.1} parent=1 // pred_fallthru
      _
    // Predicated region
    $region66: #{tpu_custom_call.1} parent=1 // pred_check
      _
    $region67: #{tpu_custom_call.1} parent=1 // pred_check_branch
      %138 = sbr.rel (0) target = $region69
    $region68: #{tpu_custom_call.1} parent=1 // pred_region
      %139 = dma.done [#allocation6], 1024
    $region69: #{tpu_custom_call.1} parent=1 // pred_fallthru
      _
    // Predicated region
    $region70: #{tpu_custom_call.1} parent=1 // pred_check
      _
    $region71: #{tpu_custom_call.1} parent=1 // pred_check_branch
      %141 = sbr.rel (0) target = $region73
    $region72: #{tpu_custom_call.1} parent=1 // pred_region
      %142 = dma.done [#allocation6], 1024
    $region73: #{tpu_custom_call.1} parent=1 // pred_fallthru
      _
    // Predicated region
    $region74: #{tpu_custom_call.1} parent=1 // pred_check
      _
    $region75: #{tpu_custom_call.1} parent=1 // pred_check_branch
      %144 = sbr.rel (0) target = $region77
    $region76: #{tpu_custom_call.1} parent=1 // pred_region
      %145 = dma.done [#allocation9], 2048
    $region77: #{tpu_custom_call.1} parent=1 // pred_fallthru
      _
    // Predicated region
    $region78: #{tpu_custom_call.1} parent=1 // pred_check
      _
    $region79: #{tpu_custom_call.1} parent=1 // pred_check_branch
      %147 = sbr.rel (0) target = $region81
    $region80: #{tpu_custom_call.1} parent=1 // pred_region
      %148 = dma.done [#allocation9], 4096
    $region81: #{tpu_custom_call.1} parent=1 // pred_fallthru
      _
    // Predicated region
    $region82: #{tpu_custom_call.1} parent=1 // pred_check
      _
    $region83: #{tpu_custom_call.1} parent=1 // pred_check_branch
      %150 = sbr.rel (0) target = $region85
    $region84: #{tpu_custom_call.1} parent=1 // pred_region
      %151 = dma.done [#allocation12], 2048
    $region85: #{tpu_custom_call.1} parent=1 // pred_fallthru
      _
    // Predicated region
    $region86: #{tpu_custom_call.1} parent=1 // pred_check
      _
    $region87: #{tpu_custom_call.1} parent=1 // pred_check_branch
      %153 = sbr.rel (0) target = $region89
    $region88: #{tpu_custom_call.1} parent=1 // pred_region
      %154 = dma.done [#allocation12], 1024
    $region89: #{tpu_custom_call.1} parent=1 // pred_fallthru
      _
    // Predicated region
    $region90: #{tpu_custom_call.1} parent=1 // pred_check
      _
    $region91: #{tpu_custom_call.1} parent=1 // pred_check_branch
      %156 = sbr.rel (0) target = $region93
    $region92: #{tpu_custom_call.1} parent=1 // pred_region
      %157 = dma.done [#allocation15], 1024
    $region93: #{tpu_custom_call.1} parent=1 // pred_fallthru
      _
    %v159 = vld [vmem:[#allocation2] sm:$0xff]
    %v160 = vpack.c.bf16 %v159, %v159
    %v161 = vld [vmem:[#allocation5] sm:$0xf]
    %v162 = vld [vmem:[#allocation5 + $0x4] sm:$0xf]
    %v163 = vld [vmem:[#allocation5 + $0x8] sm:$0xf]
    %v164 = vld [vmem:[#allocation5 + $0xc] sm:$0xf]
    %v165 = vld [vmem:[#allocation5 + $0x10] sm:$0xf]
    %v166 = vld [vmem:[#allocation5 + $0x14] sm:$0xf]
    %v167 = vld [vmem:[#allocation5 + $0x18] sm:$0xf]
    %v168 = vld [vmem:[#allocation5 + $0x1c] sm:$0xf]
    %v169 = vld [vmem:[#allocation5 + $0x20] sm:$0xf]
    %v170 = vld [vmem:[#allocation5 + $0x24] sm:$0xf]
    %v171 = vld [vmem:[#allocation5 + $0x28] sm:$0xf]
    %v172 = vld [vmem:[#allocation5 + $0x2c] sm:$0xf]
    %v173 = vld [vmem:[#allocation5 + $0x30] sm:$0xf]
    %v174 = vld [vmem:[#allocation5 + $0x34] sm:$0xf]
    %v175 = vld [vmem:[#allocation5 + $0x38] sm:$0xf]
    %v176 = vld [vmem:[#allocation5 + $0x3c] sm:$0xf]
    %v177 = vld [vmem:[%s2] sm:$0x1]
    %v179 = vlaneseq
    %v180 = vshrl.u32 %v179, 7
    %v181 = vsub.s32 0, %v180
    %v182 = vrot.slane %v177, %v181
    %v200 = vunpack.c.l.b16 %v161
    %v201 = vunpack.c.l.b16 %v162
    %v202 = vunpack.c.l.b16 %v163
    %v203 = vunpack.c.l.b16 %v164
    %v204 = vunpack.c.l.b16 %v165
    %v205 = vunpack.c.l.b16 %v166
    %v206 = vunpack.c.l.b16 %v167
    %v207 = vunpack.c.l.b16 %v168
    %v208 = vunpack.c.l.b16 %v169
    %v209 = vunpack.c.l.b16 %v170
    %v210 = vunpack.c.l.b16 %v171
    %v211 = vunpack.c.l.b16 %v172
    %v212 = vunpack.c.l.b16 %v173
    %v213 = vunpack.c.l.b16 %v174
    %v214 = vunpack.c.l.b16 %v175
    %v215 = vunpack.c.l.b16 %v176
    %v216 = vpack.c.b16 %v201, %v200
    %v217 = vpack.c.b16 %v203, %v202
    %v218 = vpack.c.b16 %v205, %v204
    %v219 = vpack.c.b16 %v207, %v206
    %v220 = vpack.c.b16 %v209, %v208
    %v221 = vpack.c.b16 %v211, %v210
    %v222 = vpack.c.b16 %v213, %v212
    %v223 = vpack.c.b16 %v215, %v214
    %232 = vmatprep.subr.bf16.mxu0 0
    %233 = vmatpush1.bf16.msra.mxu0 %v223
    %234 = vmatprep.subr.bf16.mxu0 0
    %235 = vmatpush1.bf16.msra.mxu0 %v222
    %236 = vmatprep.subr.bf16.mxu0 0
    %237 = vmatpush1.bf16.msra.mxu0 %v221
    %238 = vmatprep.subr.bf16.mxu0 0
    %239 = vmatpush1.bf16.msra.mxu0 %v220
    %240 = vmatprep.subr.bf16.mxu0 0
    %241 = vmatpush1.bf16.msra.mxu0 %v219
    %242 = vmatprep.subr.bf16.mxu0 0
    %243 = vmatpush1.bf16.msra.mxu0 %v218
    %244 = vmatprep.subr.bf16.mxu0 0
    %245 = vmatpush1.bf16.msra.mxu0 %v217
    %246 = vmatprep.subr.bf16.mxu0 0
    %247 = vmatpush1.bf16.msra.mxu0 %v216
    %248 = vmatprep.subr.bf16.mxu0 0
    %249 = vmatpush2.bf16.msra.mxu0 0
    %250 = vmatprep.subr.bf16.mxu0 0
    %251 = vmatpush2.bf16.msra.mxu0 0
    %252 = vmatprep.subr.bf16.mxu0 0
    %253 = vmatpush2.bf16.msra.mxu0 0
    %254 = vmatprep.subr.bf16.mxu0 0
    %255 = vmatpush2.bf16.msra.mxu0 0
    %256 = vmatprep.subr.bf16.mxu0 0
    %257 = vmatpush2.bf16.msra.mxu0 0
    %258 = vmatprep.subr.bf16.mxu0 0
    %259 = vmatpush2.bf16.msra.mxu0 0
    %260 = vmatprep.subr.bf16.mxu0 0
    %261 = vmatpush2.bf16.msra.mxu0 0
    %262 = vmatprep.subr.bf16.mxu0 0
    %263 = vmatpush2.bf16.msra.mxu0 0
    %264 = vmatprep.mubr.bf16.mxu0 0
    %265 = vmatmul.mubr.bf16.gmra.mxu0 %v160
    %v266 = vpop.f32.mrf.mxu0
    %v267 = vadd.f32 %v182, %v266
    %v268 = vpop.f32.mrf.mxu0
    %v269 = vpop.f32.mrf.mxu0
    %v270 = vpop.f32.mrf.mxu0
    %271 = vdwg.mxu0
    %v272 = vmul.f32 %v267, 0.01
    %v273 = vmax.f32 %v267, %v272
    %v274 = vpack.c.bf16 %v273, %v273
    %v275 = vld [vmem:[#allocation7] sm:$0xf]
    %v276 = vld [vmem:[#allocation7 + $0x4] sm:$0xf]
    %v277 = vld [vmem:[#allocation7 + $0x8] sm:$0xf]
    %v278 = vld [vmem:[#allocation7 + $0xc] sm:$0xf]
    %v279 = vld [vmem:[#allocation7 + $0x10] sm:$0xf]
    %v280 = vld [vmem:[#allocation7 + $0x14] sm:$0xf]
    %v281 = vld [vmem:[#allocation7 + $0x18] sm:$0xf]
    %v282 = vld [vmem:[#allocation7 + $0x1c] sm:$0xf]
    %v283 = vld [vmem:[#allocation7 + $0x20] sm:$0xf]
    %v284 = vld [vmem:[#allocation7 + $0x24] sm:$0xf]
    %v285 = vld [vmem:[#allocation7 + $0x28] sm:$0xf]
    %v286 = vld [vmem:[#allocation7 + $0x2c] sm:$0xf]
    %v287 = vld [vmem:[#allocation7 + $0x30] sm:$0xf]
    %v288 = vld [vmem:[#allocation7 + $0x34] sm:$0xf]
    %v289 = vld [vmem:[#allocation7 + $0x38] sm:$0xf]
    %v290 = vld [vmem:[#allocation7 + $0x3c] sm:$0xf]
    %v291 = vld [vmem:[%s4] sm:$0x1]
    %v293 = vlaneseq
    %v294 = vshrl.u32 %v293, 7
    %v295 = vsub.s32 0, %v294
    %v296 = vrot.slane %v291, %v295
    %v314 = vunpack.c.l.b16 %v275
    %v315 = vunpack.c.l.b16 %v276
    %v316 = vunpack.c.l.b16 %v277
    %v317 = vunpack.c.l.b16 %v278
    %v318 = vunpack.c.l.b16 %v279
    %v319 = vunpack.c.l.b16 %v280
    %v320 = vunpack.c.l.b16 %v281
    %v321 = vunpack.c.l.b16 %v282
    %v322 = vunpack.c.l.b16 %v283
    %v323 = vunpack.c.l.b16 %v284
    %v324 = vunpack.c.l.b16 %v285
    %v325 = vunpack.c.l.b16 %v286
    %v326 = vunpack.c.l.b16 %v287
    %v327 = vunpack.c.l.b16 %v288
    %v328 = vunpack.c.l.b16 %v289
    %v329 = vunpack.c.l.b16 %v290
    %v330 = vpack.c.b16 %v315, %v314
    %v331 = vpack.c.b16 %v317, %v316
    %v332 = vpack.c.b16 %v319, %v318
    %v333 = vpack.c.b16 %v321, %v320
    %v334 = vpack.c.b16 %v323, %v322
    %v335 = vpack.c.b16 %v325, %v324
    %v336 = vpack.c.b16 %v327, %v326
    %v337 = vpack.c.b16 %v329, %v328
    %346 = vmatprep.subr.bf16.mxu0 0
    %347 = vmatpush1.bf16.msra.mxu0 %v337
    %348 = vmatprep.subr.bf16.mxu0 0
    %349 = vmatpush1.bf16.msra.mxu0 %v336
    %350 = vmatprep.subr.bf16.mxu0 0
    %351 = vmatpush1.bf16.msra.mxu0 %v335
    %352 = vmatprep.subr.bf16.mxu0 0
    %353 = vmatpush1.bf16.msra.mxu0 %v334
    %354 = vmatprep.subr.bf16.mxu0 0
    %355 = vmatpush1.bf16.msra.mxu0 %v333
    %356 = vmatprep.subr.bf16.mxu0 0
    %357 = vmatpush1.bf16.msra.mxu0 %v332
    %358 = vmatprep.subr.bf16.mxu0 0
    %359 = vmatpush1.bf16.msra.mxu0 %v331
    %360 = vmatprep.subr.bf16.mxu0 0
    %361 = vmatpush1.bf16.msra.mxu0 %v330
    %362 = vmatprep.subr.bf16.mxu0 0
    %363 = vmatpush2.bf16.msra.mxu0 0
    %364 = vmatprep.subr.bf16.mxu0 0
    %365 = vmatpush2.bf16.msra.mxu0 0
    %366 = vmatprep.subr.bf16.mxu0 0
    %367 = vmatpush2.bf16.msra.mxu0 0
    %368 = vmatprep.subr.bf16.mxu0 0
    %369 = vmatpush2.bf16.msra.mxu0 0
    %370 = vmatprep.subr.bf16.mxu0 0
    %371 = vmatpush2.bf16.msra.mxu0 0
    %372 = vmatprep.subr.bf16.mxu0 0
    %373 = vmatpush2.bf16.msra.mxu0 0
    %374 = vmatprep.subr.bf16.mxu0 0
    %375 = vmatpush2.bf16.msra.mxu0 0
    %376 = vmatprep.subr.bf16.mxu0 0
    %377 = vmatpush2.bf16.msra.mxu0 0
    %378 = vmatprep.mubr.bf16.mxu0 0
    %379 = vmatmul.mubr.bf16.gmra.mxu0 %v274
    %v380 = vpop.f32.mrf.mxu0
    %v381 = vadd.f32 %v296, %v380
    %v382 = vpop.f32.mrf.mxu0
    %v383 = vpop.f32.mrf.mxu0
    %v384 = vpop.f32.mrf.mxu0
    %385 = vdwg.mxu0
    %v386 = vmul.f32 %v381, 0.01
    %v387 = vmax.f32 %v381, %v386
    %v388 = vpack.c.bf16 %v387, %v387
    %v389 = vld [vmem:[#allocation8] sm:$0xff]
    %v390 = vld [vmem:[#allocation8 + $0x8] sm:$0xff]
    %v391 = vld [vmem:[#allocation8 + $0x10] sm:$0xff]
    %v392 = vld [vmem:[#allocation8 + $0x18] sm:$0xff]
    %v393 = vld [vmem:[#allocation8 + $0x20] sm:$0xff]
    %v394 = vld [vmem:[#allocation8 + $0x28] sm:$0xff]
    %v395 = vld [vmem:[#allocation8 + $0x30] sm:$0xff]
    %v396 = vld [vmem:[#allocation8 + $0x38] sm:$0xff]
    %v397 = vld [vmem:[#allocation8 + $0x40] sm:$0xff]
    %v398 = vld [vmem:[#allocation8 + $0x48] sm:$0xff]
    %v399 = vld [vmem:[#allocation8 + $0x50] sm:$0xff]
    %v400 = vld [vmem:[#allocation8 + $0x58] sm:$0xff]
    %v401 = vld [vmem:[#allocation8 + $0x60] sm:$0xff]
    %v402 = vld [vmem:[#allocation8 + $0x68] sm:$0xff]
    %v403 = vld [vmem:[#allocation8 + $0x70] sm:$0xff]
    %v404 = vld [vmem:[#allocation8 + $0x78] sm:$0xff]
    %v405 = vld [vmem:[%s6] sm:$0x3]
    %v407 = vlaneseq
    %v408 = vshrl.u32 %v407, 7
    %v409 = vsub.s32 0, %v408
    %v410 = vrot.slane %v405, %v409
    %v411 = vlaneseq
    %v412 = vshrl.u32 %v411, 7
    %v413 = vsub.s32 1, %v412
    %v414 = vrot.slane %v405, %v413
    %v433 = vunpack.c.l.b16 %v389
    %v434 = vunpack.c.h.b16 %v389
    %v435 = vunpack.c.l.b16 %v390
    %v436 = vunpack.c.h.b16 %v390
    %v437 = vunpack.c.l.b16 %v391
    %v438 = vunpack.c.h.b16 %v391
    %v439 = vunpack.c.l.b16 %v392
    %v440 = vunpack.c.h.b16 %v392
    %v441 = vunpack.c.l.b16 %v393
    %v442 = vunpack.c.h.b16 %v393
    %v443 = vunpack.c.l.b16 %v394
    %v444 = vunpack.c.h.b16 %v394
    %v445 = vunpack.c.l.b16 %v395
    %v446 = vunpack.c.h.b16 %v395
    %v447 = vunpack.c.l.b16 %v396
    %v448 = vunpack.c.h.b16 %v396
    %v449 = vunpack.c.l.b16 %v397
    %v450 = vunpack.c.h.b16 %v397
    %v451 = vunpack.c.l.b16 %v398
    %v452 = vunpack.c.h.b16 %v398
    %v453 = vunpack.c.l.b16 %v399
    %v454 = vunpack.c.h.b16 %v399
    %v455 = vunpack.c.l.b16 %v400
    %v456 = vunpack.c.h.b16 %v400
    %v457 = vunpack.c.l.b16 %v401
    %v458 = vunpack.c.h.b16 %v401
    %v459 = vunpack.c.l.b16 %v402
    %v460 = vunpack.c.h.b16 %v402
    %v461 = vunpack.c.l.b16 %v403
    %v462 = vunpack.c.h.b16 %v403
    %v463 = vunpack.c.l.b16 %v404
    %v464 = vunpack.c.h.b16 %v404
    %v465 = vpack.c.b16 %v435, %v433
    %v466 = vpack.c.b16 %v436, %v434
    %v467 = vpack.c.b16 %v439, %v437
    %v468 = vpack.c.b16 %v440, %v438
    %v469 = vpack.c.b16 %v443, %v441
    %v470 = vpack.c.b16 %v444, %v442
    %v471 = vpack.c.b16 %v447, %v445
    %v472 = vpack.c.b16 %v448, %v446
    %v473 = vpack.c.b16 %v451, %v449
    %v474 = vpack.c.b16 %v452, %v450
    %v475 = vpack.c.b16 %v455, %v453
    %v476 = vpack.c.b16 %v456, %v454
    %v477 = vpack.c.b16 %v459, %v457
    %v478 = vpack.c.b16 %v460, %v458
    %v479 = vpack.c.b16 %v463, %v461
    %v480 = vpack.c.b16 %v464, %v462
    %497 = vmatprep.subr.bf16.mxu0 %v480
    %498 = vmatpush1.bf16.msra.mxu0 %v479
    %499 = vmatprep.subr.bf16.mxu0 %v478
    %500 = vmatpush1.bf16.msra.mxu0 %v477
    %501 = vmatprep.subr.bf16.mxu0 %v476
    %502 = vmatpush1.bf16.msra.mxu0 %v475
    %503 = vmatprep.subr.bf16.mxu0 %v474
    %504 = vmatpush1.bf16.msra.mxu0 %v473
    %505 = vmatprep.subr.bf16.mxu0 %v472
    %506 = vmatpush1.bf16.msra.mxu0 %v471
    %507 = vmatprep.subr.bf16.mxu0 %v470
    %508 = vmatpush1.bf16.msra.mxu0 %v469
    %509 = vmatprep.subr.bf16.mxu0 %v468
    %510 = vmatpush1.bf16.msra.mxu0 %v467
    %511 = vmatprep.subr.bf16.mxu0 %v466
    %512 = vmatpush1.bf16.msra.mxu0 %v465
    %513 = vmatprep.subr.bf16.mxu0 0
    %514 = vmatpush2.bf16.msra.mxu0 0
    %515 = vmatprep.subr.bf16.mxu0 0
    %516 = vmatpush2.bf16.msra.mxu0 0
    %517 = vmatprep.subr.bf16.mxu0 0
    %518 = vmatpush2.bf16.msra.mxu0 0
    %519 = vmatprep.subr.bf16.mxu0 0
    %520 = vmatpush2.bf16.msra.mxu0 0
    %521 = vmatprep.subr.bf16.mxu0 0
    %522 = vmatpush2.bf16.msra.mxu0 0
    %523 = vmatprep.subr.bf16.mxu0 0
    %524 = vmatpush2.bf16.msra.mxu0 0
    %525 = vmatprep.subr.bf16.mxu0 0
    %526 = vmatpush2.bf16.msra.mxu0 0
    %527 = vmatprep.subr.bf16.mxu0 0
    %528 = vmatpush2.bf16.msra.mxu0 0
    %529 = vmatprep.mubr.bf16.mxu0 0
    %530 = vmatmul.mubr.bf16.gmra.mxu0 %v388
    %v531 = vpop.f32.mrf.mxu0
    %v532 = vadd.f32 %v410, %v531
    %v533 = vpop.f32.mrf.mxu0
    %v534 = vadd.f32 %v414, %v533
    %v535 = vpop.f32.mrf.mxu0
    %v536 = vpop.f32.mrf.mxu0
    %537 = vdwg.mxu0
    %v538 = vmul.f32 %v532, 0.01
    %v539 = vmul.f32 %v534, 0.01
    %v540 = vmax.f32 %v532, %v538
    %v541 = vmax.f32 %v534, %v539
    %v542 = vpack.c.bf16 %v540, %v540
    %v543 = vpack.c.bf16 %v541, %v541
    %v544 = vld [vmem:[#allocation10] sm:$0xff]
    %v545 = vld [vmem:[#allocation10 + $0x8] sm:$0xff]
    %v546 = vld [vmem:[#allocation10 + $0x10] sm:$0xff]
    %v547 = vld [vmem:[#allocation10 + $0x18] sm:$0xff]
    %v548 = vld [vmem:[#allocation10 + $0x20] sm:$0xff]
    %v549 = vld [vmem:[#allocation10 + $0x28] sm:$0xff]
    %v550 = vld [vmem:[#allocation10 + $0x30] sm:$0xff]
    %v551 = vld [vmem:[#allocation10 + $0x38] sm:$0xff]
    %v552 = vld [vmem:[#allocation10 + $0x40] sm:$0xff]
    %v553 = vld [vmem:[#allocation10 + $0x48] sm:$0xff]
    %v554 = vld [vmem:[#allocation10 + $0x50] sm:$0xff]
    %v555 = vld [vmem:[#allocation10 + $0x58] sm:$0xff]
    %v556 = vld [vmem:[#allocation10 + $0x60] sm:$0xff]
    %v557 = vld [vmem:[#allocation10 + $0x68] sm:$0xff]
    %v558 = vld [vmem:[#allocation10 + $0x70] sm:$0xff]
    %v559 = vld [vmem:[#allocation10 + $0x78] sm:$0xff]
    %v560 = vld [vmem:[#allocation10 + $0x80] sm:$0xff]
    %v561 = vld [vmem:[#allocation10 + $0x88] sm:$0xff]
    %v562 = vld [vmem:[#allocation10 + $0x90] sm:$0xff]
    %v563 = vld [vmem:[#allocation10 + $0x98] sm:$0xff]
    %v564 = vld [vmem:[#allocation10 + $0xa0] sm:$0xff]
    %v565 = vld [vmem:[#allocation10 + $0xa8] sm:$0xff]
    %v566 = vld [vmem:[#allocation10 + $0xb0] sm:$0xff]
    %v567 = vld [vmem:[#allocation10 + $0xb8] sm:$0xff]
    %v568 = vld [vmem:[#allocation10 + $0xc0] sm:$0xff]
    %v569 = vld [vmem:[#allocation10 + $0xc8] sm:$0xff]
    %v570 = vld [vmem:[#allocation10 + $0xd0] sm:$0xff]
    %v571 = vld [vmem:[#allocation10 + $0xd8] sm:$0xff]
    %v572 = vld [vmem:[#allocation10 + $0xe0] sm:$0xff]
    %v573 = vld [vmem:[#allocation10 + $0xe8] sm:$0xff]
    %v574 = vld [vmem:[#allocation10 + $0xf0] sm:$0xff]
    %v575 = vld [vmem:[#allocation10 + $0xf8] sm:$0xff]
    %v576 = vld [vmem:[%s8] sm:$0x3]
    %v578 = vlaneseq
    %v579 = vshrl.u32 %v578, 7
    %v580 = vsub.s32 0, %v579
    %v581 = vrot.slane %v576, %v580
    %v582 = vlaneseq
    %v583 = vshrl.u32 %v582, 7
    %v584 = vsub.s32 1, %v583
    %v585 = vrot.slane %v576, %v584
    %v620 = vunpack.c.l.b16 %v544
    %v621 = vunpack.c.h.b16 %v544
    %v622 = vunpack.c.l.b16 %v545
    %v623 = vunpack.c.h.b16 %v545
    %v624 = vunpack.c.l.b16 %v546
    %v625 = vunpack.c.h.b16 %v546
    %v626 = vunpack.c.l.b16 %v547
    %v627 = vunpack.c.h.b16 %v547
    %v628 = vunpack.c.l.b16 %v548
    %v629 = vunpack.c.h.b16 %v548
    %v630 = vunpack.c.l.b16 %v549
    %v631 = vunpack.c.h.b16 %v549
    %v632 = vunpack.c.l.b16 %v550
    %v633 = vunpack.c.h.b16 %v550
    %v634 = vunpack.c.l.b16 %v551
    %v635 = vunpack.c.h.b16 %v551
    %v636 = vunpack.c.l.b16 %v552
    %v637 = vunpack.c.h.b16 %v552
    %v638 = vunpack.c.l.b16 %v553
    %v639 = vunpack.c.h.b16 %v553
    %v640 = vunpack.c.l.b16 %v554
    %v641 = vunpack.c.h.b16 %v554
    %v642 = vunpack.c.l.b16 %v555
    %v643 = vunpack.c.h.b16 %v555
    %v644 = vunpack.c.l.b16 %v556
    %v645 = vunpack.c.h.b16 %v556
    %v646 = vunpack.c.l.b16 %v557
    %v647 = vunpack.c.h.b16 %v557
    %v648 = vunpack.c.l.b16 %v558
    %v649 = vunpack.c.h.b16 %v558
    %v650 = vunpack.c.l.b16 %v559
    %v651 = vunpack.c.h.b16 %v559
    %v652 = vunpack.c.l.b16 %v560
    %v653 = vunpack.c.h.b16 %v560
    %v654 = vunpack.c.l.b16 %v561
    %v655 = vunpack.c.h.b16 %v561
    %v656 = vunpack.c.l.b16 %v562
    %v657 = vunpack.c.h.b16 %v562
    %v658 = vunpack.c.l.b16 %v563
    %v659 = vunpack.c.h.b16 %v563
    %v660 = vunpack.c.l.b16 %v564
    %v661 = vunpack.c.h.b16 %v564
    %v662 = vunpack.c.l.b16 %v565
    %v663 = vunpack.c.h.b16 %v565
    %v664 = vunpack.c.l.b16 %v566
    %v665 = vunpack.c.h.b16 %v566
    %v666 = vunpack.c.l.b16 %v567
    %v667 = vunpack.c.h.b16 %v567
    %v668 = vunpack.c.l.b16 %v568
    %v669 = vunpack.c.h.b16 %v568
    %v670 = vunpack.c.l.b16 %v569
    %v671 = vunpack.c.h.b16 %v569
    %v672 = vunpack.c.l.b16 %v570
    %v673 = vunpack.c.h.b16 %v570
    %v674 = vunpack.c.l.b16 %v571
    %v675 = vunpack.c.h.b16 %v571
    %v676 = vunpack.c.l.b16 %v572
    %v677 = vunpack.c.h.b16 %v572
    %v678 = vunpack.c.l.b16 %v573
    %v679 = vunpack.c.h.b16 %v573
    %v680 = vunpack.c.l.b16 %v574
    %v681 = vunpack.c.h.b16 %v574
    %v682 = vunpack.c.l.b16 %v575
    %v683 = vunpack.c.h.b16 %v575
    %v684 = vpack.c.b16 %v622, %v620
    %v685 = vpack.c.b16 %v623, %v621
    %v686 = vpack.c.b16 %v626, %v624
    %v687 = vpack.c.b16 %v627, %v625
    %v688 = vpack.c.b16 %v630, %v628
    %v689 = vpack.c.b16 %v631, %v629
    %v690 = vpack.c.b16 %v634, %v632
    %v691 = vpack.c.b16 %v635, %v633
    %v692 = vpack.c.b16 %v638, %v636
    %v693 = vpack.c.b16 %v639, %v637
    %v694 = vpack.c.b16 %v642, %v640
    %v695 = vpack.c.b16 %v643, %v641
    %v696 = vpack.c.b16 %v646, %v644
    %v697 = vpack.c.b16 %v647, %v645
    %v698 = vpack.c.b16 %v650, %v648
    %v699 = vpack.c.b16 %v651, %v649
    %v700 = vpack.c.b16 %v654, %v652
    %v701 = vpack.c.b16 %v655, %v653
    %v702 = vpack.c.b16 %v658, %v656
    %v703 = vpack.c.b16 %v659, %v657
    %v704 = vpack.c.b16 %v662, %v660
    %v705 = vpack.c.b16 %v663, %v661
    %v706 = vpack.c.b16 %v666, %v664
    %v707 = vpack.c.b16 %v667, %v665
    %v708 = vpack.c.b16 %v670, %v668
    %v709 = vpack.c.b16 %v671, %v669
    %v710 = vpack.c.b16 %v674, %v672
    %v711 = vpack.c.b16 %v675, %v673
    %v712 = vpack.c.b16 %v678, %v676
    %v713 = vpack.c.b16 %v679, %v677
    %v714 = vpack.c.b16 %v682, %v680
    %v715 = vpack.c.b16 %v683, %v681
    %748 = vmatprep.subr.bf16.mxu0 %v699
    %749 = vmatpush1.bf16.msra.mxu0 %v698
    %750 = vmatprep.subr.bf16.mxu0 %v697
    %751 = vmatpush1.bf16.msra.mxu0 %v696
    %752 = vmatprep.subr.bf16.mxu0 %v695
    %753 = vmatpush1.bf16.msra.mxu0 %v694
    %754 = vmatprep.subr.bf16.mxu0 %v693
    %755 = vmatpush1.bf16.msra.mxu0 %v692
    %756 = vmatprep.subr.bf16.mxu0 %v691
    %757 = vmatpush1.bf16.msra.mxu0 %v690
    %758 = vmatprep.subr.bf16.mxu0 %v689
    %759 = vmatpush1.bf16.msra.mxu0 %v688
    %760 = vmatprep.subr.bf16.mxu0 %v687
    %761 = vmatpush1.bf16.msra.mxu0 %v686
    %762 = vmatprep.subr.bf16.mxu0 %v685
    %763 = vmatpush1.bf16.msra.mxu0 %v684
    %764 = vmatprep.subr.bf16.mxu0 %v715
    %765 = vmatpush2.bf16.msra.mxu0 %v714
    %766 = vmatprep.subr.bf16.mxu0 %v713
    %767 = vmatpush2.bf16.msra.mxu0 %v712
    %768 = vmatprep.subr.bf16.mxu0 %v711
    %769 = vmatpush2.bf16.msra.mxu0 %v710
    %770 = vmatprep.subr.bf16.mxu0 %v709
    %771 = vmatpush2.bf16.msra.mxu0 %v708
    %772 = vmatprep.subr.bf16.mxu0 %v707
    %773 = vmatpush2.bf16.msra.mxu0 %v706
    %774 = vmatprep.subr.bf16.mxu0 %v705
    %775 = vmatpush2.bf16.msra.mxu0 %v704
    %776 = vmatprep.subr.bf16.mxu0 %v703
    %777 = vmatpush2.bf16.msra.mxu0 %v702
    %778 = vmatprep.subr.bf16.mxu0 %v701
    %779 = vmatpush2.bf16.msra.mxu0 %v700
    %780 = vmatprep.mubr.bf16.mxu0 %v543
    %781 = vmatmul.mubr.bf16.gmra.mxu0 %v542
    %v782 = vpop.f32.mrf.mxu0
    %v783 = vadd.f32 %v581, %v782
    %v784 = vpop.f32.mrf.mxu0
    %v785 = vadd.f32 %v585, %v784
    %v786 = vpop.f32.mrf.mxu0
    %v787 = vpop.f32.mrf.mxu0
    %788 = vdwg.mxu0
    %v789 = vmul.f32 %v783, 0.01
    %v790 = vmul.f32 %v785, 0.01
    %v791 = vmax.f32 %v783, %v789
    %v792 = vmax.f32 %v785, %v790
    %v793 = vpack.c.bf16 %v791, %v791
    %v794 = vpack.c.bf16 %v792, %v792
    %v795 = vld [vmem:[#allocation11] sm:$0xf]
    %v796 = vld [vmem:[#allocation11 + $0x4] sm:$0xf]
    %v797 = vld [vmem:[#allocation11 + $0x8] sm:$0xf]
    %v798 = vld [vmem:[#allocation11 + $0xc] sm:$0xf]
    %v799 = vld [vmem:[#allocation11 + $0x10] sm:$0xf]
    %v800 = vld [vmem:[#allocation11 + $0x14] sm:$0xf]
    %v801 = vld [vmem:[#allocation11 + $0x18] sm:$0xf]
    %v802 = vld [vmem:[#allocation11 + $0x1c] sm:$0xf]
    %v803 = vld [vmem:[#allocation11 + $0x20] sm:$0xf]
    %v804 = vld [vmem:[#allocation11 + $0x24] sm:$0xf]
    %v805 = vld [vmem:[#allocation11 + $0x28] sm:$0xf]
    %v806 = vld [vmem:[#allocation11 + $0x2c] sm:$0xf]
    %v807 = vld [vmem:[#allocation11 + $0x30] sm:$0xf]
    %v808 = vld [vmem:[#allocation11 + $0x34] sm:$0xf]
    %v809 = vld [vmem:[#allocation11 + $0x38] sm:$0xf]
    %v810 = vld [vmem:[#allocation11 + $0x3c] sm:$0xf]
    %v811 = vld [vmem:[#allocation11 + $0x40] sm:$0xf]
    %v812 = vld [vmem:[#allocation11 + $0x44] sm:$0xf]
    %v813 = vld [vmem:[#allocation11 + $0x48] sm:$0xf]
    %v814 = vld [vmem:[#allocation11 + $0x4c] sm:$0xf]
    %v815 = vld [vmem:[#allocation11 + $0x50] sm:$0xf]
    %v816 = vld [vmem:[#allocation11 + $0x54] sm:$0xf]
    %v817 = vld [vmem:[#allocation11 + $0x58] sm:$0xf]
    %v818 = vld [vmem:[#allocation11 + $0x5c] sm:$0xf]
    %v819 = vld [vmem:[#allocation11 + $0x60] sm:$0xf]
    %v820 = vld [vmem:[#allocation11 + $0x64] sm:$0xf]
    %v821 = vld [vmem:[#allocation11 + $0x68] sm:$0xf]
    %v822 = vld [vmem:[#allocation11 + $0x6c] sm:$0xf]
    %v823 = vld [vmem:[#allocation11 + $0x70] sm:$0xf]
    %v824 = vld [vmem:[#allocation11 + $0x74] sm:$0xf]
    %v825 = vld [vmem:[#allocation11 + $0x78] sm:$0xf]
    %v826 = vld [vmem:[#allocation11 + $0x7c] sm:$0xf]
    %v827 = vld [vmem:[%s10] sm:$0x1]
    %v829 = vlaneseq
    %v830 = vshrl.u32 %v829, 7
    %v831 = vsub.s32 0, %v830
    %v832 = vrot.slane %v827, %v831
    %v866 = vunpack.c.l.b16 %v795
    %v867 = vunpack.c.l.b16 %v796
    %v868 = vunpack.c.l.b16 %v797
    %v869 = vunpack.c.l.b16 %v798
    %v870 = vunpack.c.l.b16 %v799
    %v871 = vunpack.c.l.b16 %v800
    %v872 = vunpack.c.l.b16 %v801
    %v873 = vunpack.c.l.b16 %v802
    %v874 = vunpack.c.l.b16 %v803
    %v875 = vunpack.c.l.b16 %v804
    %v876 = vunpack.c.l.b16 %v805
    %v877 = vunpack.c.l.b16 %v806
    %v878 = vunpack.c.l.b16 %v807
    %v879 = vunpack.c.l.b16 %v808
    %v880 = vunpack.c.l.b16 %v809
    %v881 = vunpack.c.l.b16 %v810
    %v882 = vunpack.c.l.b16 %v811
    %v883 = vunpack.c.l.b16 %v812
    %v884 = vunpack.c.l.b16 %v813
    %v885 = vunpack.c.l.b16 %v814
    %v886 = vunpack.c.l.b16 %v815
    %v887 = vunpack.c.l.b16 %v816
    %v888 = vunpack.c.l.b16 %v817
    %v889 = vunpack.c.l.b16 %v818
    %v890 = vunpack.c.l.b16 %v819
    %v891 = vunpack.c.l.b16 %v820
    %v892 = vunpack.c.l.b16 %v821
    %v893 = vunpack.c.l.b16 %v822
    %v894 = vunpack.c.l.b16 %v823
    %v895 = vunpack.c.l.b16 %v824
    %v896 = vunpack.c.l.b16 %v825
    %v897 = vunpack.c.l.b16 %v826
    %v898 = vpack.c.b16 %v867, %v866
    %v899 = vpack.c.b16 %v869, %v868
    %v900 = vpack.c.b16 %v871, %v870
    %v901 = vpack.c.b16 %v873, %v872
    %v902 = vpack.c.b16 %v875, %v874
    %v903 = vpack.c.b16 %v877, %v876
    %v904 = vpack.c.b16 %v879, %v878
    %v905 = vpack.c.b16 %v881, %v880
    %v906 = vpack.c.b16 %v883, %v882
    %v907 = vpack.c.b16 %v885, %v884
    %v908 = vpack.c.b16 %v887, %v886
    %v909 = vpack.c.b16 %v889, %v888
    %v910 = vpack.c.b16 %v891, %v890
    %v911 = vpack.c.b16 %v893, %v892
    %v912 = vpack.c.b16 %v895, %v894
    %v913 = vpack.c.b16 %v897, %v896
    %930 = vmatprep.subr.bf16.mxu0 0
    %931 = vmatpush1.bf16.msra.mxu0 %v905
    %932 = vmatprep.subr.bf16.mxu0 0
    %933 = vmatpush1.bf16.msra.mxu0 %v904
    %934 = vmatprep.subr.bf16.mxu0 0
    %935 = vmatpush1.bf16.msra.mxu0 %v903
    %936 = vmatprep.subr.bf16.mxu0 0
    %937 = vmatpush1.bf16.msra.mxu0 %v902
    %938 = vmatprep.subr.bf16.mxu0 0
    %939 = vmatpush1.bf16.msra.mxu0 %v901
    %940 = vmatprep.subr.bf16.mxu0 0
    %941 = vmatpush1.bf16.msra.mxu0 %v900
    %942 = vmatprep.subr.bf16.mxu0 0
    %943 = vmatpush1.bf16.msra.mxu0 %v899
    %944 = vmatprep.subr.bf16.mxu0 0
    %945 = vmatpush1.bf16.msra.mxu0 %v898
    %946 = vmatprep.subr.bf16.mxu0 0
    %947 = vmatpush2.bf16.msra.mxu0 %v913
    %948 = vmatprep.subr.bf16.mxu0 0
    %949 = vmatpush2.bf16.msra.mxu0 %v912
    %950 = vmatprep.subr.bf16.mxu0 0
    %951 = vmatpush2.bf16.msra.mxu0 %v911
    %952 = vmatprep.subr.bf16.mxu0 0
    %953 = vmatpush2.bf16.msra.mxu0 %v910
    %954 = vmatprep.subr.bf16.mxu0 0
    %955 = vmatpush2.bf16.msra.mxu0 %v909
    %956 = vmatprep.subr.bf16.mxu0 0
    %957 = vmatpush2.bf16.msra.mxu0 %v908
    %958 = vmatprep.subr.bf16.mxu0 0
    %959 = vmatpush2.bf16.msra.mxu0 %v907
    %960 = vmatprep.subr.bf16.mxu0 0
    %961 = vmatpush2.bf16.msra.mxu0 %v906
    %962 = vmatprep.mubr.bf16.mxu0 %v794
    %963 = vmatmul.mubr.bf16.gmra.mxu0 %v793
    %v964 = vpop.f32.mrf.mxu0
    %v965 = vadd.f32 %v832, %v964
    %v966 = vpop.f32.mrf.mxu0
    %v967 = vpop.f32.mrf.mxu0
    %v968 = vpop.f32.mrf.mxu0
    %969 = vdwg.mxu0
    %v970 = vmul.f32 %v965, 0.01
    %v971 = vmax.f32 %v965, %v970
    %v972 = vpack.c.bf16 %v971, %v971
    %v973 = vld [vmem:[#allocation13] sm:$0xf]
    %v974 = vld [vmem:[#allocation13 + $0x4] sm:$0xf]
    %v975 = vld [vmem:[#allocation13 + $0x8] sm:$0xf]
    %v976 = vld [vmem:[#allocation13 + $0xc] sm:$0xf]
    %v977 = vld [vmem:[#allocation13 + $0x10] sm:$0xf]
    %v978 = vld [vmem:[#allocation13 + $0x14] sm:$0xf]
    %v979 = vld [vmem:[#allocation13 + $0x18] sm:$0xf]
    %v980 = vld [vmem:[#allocation13 + $0x1c] sm:$0xf]
    %v981 = vld [vmem:[#allocation13 + $0x20] sm:$0xf]
    %v982 = vld [vmem:[#allocation13 + $0x24] sm:$0xf]
    %v983 = vld [vmem:[#allocation13 + $0x28] sm:$0xf]
    %v984 = vld [vmem:[#allocation13 + $0x2c] sm:$0xf]
    %v985 = vld [vmem:[#allocation13 + $0x30] sm:$0xf]
    %v986 = vld [vmem:[#allocation13 + $0x34] sm:$0xf]
    %v987 = vld [vmem:[#allocation13 + $0x38] sm:$0xf]
    %v988 = vld [vmem:[#allocation13 + $0x3c] sm:$0xf]
    %v989 = vld [vmem:[%s12] sm:$0x1]
    %v991 = vlaneseq
    %v992 = vshrl.u32 %v991, 7
    %v993 = vsub.s32 0, %v992
    %v994 = vrot.slane %v989, %v993
    %v1012 = vunpack.c.l.b16 %v973
    %v1013 = vunpack.c.l.b16 %v974
    %v1014 = vunpack.c.l.b16 %v975
    %v1015 = vunpack.c.l.b16 %v976
    %v1016 = vunpack.c.l.b16 %v977
    %v1017 = vunpack.c.l.b16 %v978
    %v1018 = vunpack.c.l.b16 %v979
    %v1019 = vunpack.c.l.b16 %v980
    %v1020 = vunpack.c.l.b16 %v981
    %v1021 = vunpack.c.l.b16 %v982
    %v1022 = vunpack.c.l.b16 %v983
    %v1023 = vunpack.c.l.b16 %v984
    %v1024 = vunpack.c.l.b16 %v985
    %v1025 = vunpack.c.l.b16 %v986
    %v1026 = vunpack.c.l.b16 %v987
    %v1027 = vunpack.c.l.b16 %v988
    %v1028 = vpack.c.b16 %v1013, %v1012
    %v1029 = vpack.c.b16 %v1015, %v1014
    %v1030 = vpack.c.b16 %v1017, %v1016
    %v1031 = vpack.c.b16 %v1019, %v1018
    %v1032 = vpack.c.b16 %v1021, %v1020
    %v1033 = vpack.c.b16 %v1023, %v1022
    %v1034 = vpack.c.b16 %v1025, %v1024
    %v1035 = vpack.c.b16 %v1027, %v1026
    %1044 = vmatprep.subr.bf16.mxu0 0
    %1045 = vmatpush1.bf16.msra.mxu0 %v1035
    %1046 = vmatprep.subr.bf16.mxu0 0
    %1047 = vmatpush1.bf16.msra.mxu0 %v1034
    %1048 = vmatprep.subr.bf16.mxu0 0
    %1049 = vmatpush1.bf16.msra.mxu0 %v1033
    %1050 = vmatprep.subr.bf16.mxu0 0
    %1051 = vmatpush1.bf16.msra.mxu0 %v1032
    %1052 = vmatprep.subr.bf16.mxu0 0
    %1053 = vmatpush1.bf16.msra.mxu0 %v1031
    %1054 = vmatprep.subr.bf16.mxu0 0
    %1055 = vmatpush1.bf16.msra.mxu0 %v1030
    %1056 = vmatprep.subr.bf16.mxu0 0
    %1057 = vmatpush1.bf16.msra.mxu0 %v1029
    %1058 = vmatprep.subr.bf16.mxu0 0
    %1059 = vmatpush1.bf16.msra.mxu0 %v1028
    %1060 = vmatprep.subr.bf16.mxu0 0
    %1061 = vmatpush2.bf16.msra.mxu0 0
    %1062 = vmatprep.subr.bf16.mxu0 0
    %1063 = vmatpush2.bf16.msra.mxu0 0
    %1064 = vmatprep.subr.bf16.mxu0 0
    %1065 = vmatpush2.bf16.msra.mxu0 0
    %1066 = vmatprep.subr.bf16.mxu0 0
    %1067 = vmatpush2.bf16.msra.mxu0 0
    %1068 = vmatprep.subr.bf16.mxu0 0
    %1069 = vmatpush2.bf16.msra.mxu0 0
    %1070 = vmatprep.subr.bf16.mxu0 0
    %1071 = vmatpush2.bf16.msra.mxu0 0
    %1072 = vmatprep.subr.bf16.mxu0 0
    %1073 = vmatpush2.bf16.msra.mxu0 0
    %1074 = vmatprep.subr.bf16.mxu0 0
    %1075 = vmatpush2.bf16.msra.mxu0 0
    %1076 = vmatprep.mubr.bf16.mxu0 0
    %1077 = vmatmul.mubr.bf16.gmra.mxu0 %v972
    %v1078 = vpop.f32.mrf.mxu0
    %v1079 = vadd.f32 %v994, %v1078
    %v1080 = vpop.f32.mrf.mxu0
    %v1081 = vpop.f32.mrf.mxu0
    %v1082 = vpop.f32.mrf.mxu0
    %1083 = vdwg.mxu0
    %v1084 = vmul.f32 %v1079, 0.01
    %v1085 = vmax.f32 %v1079, %v1084
    %v1086 = vpack.c.bf16 %v1085, %v1085
    %v1087 = vld [vmem:[#allocation14] sm:$0xf]
    %v1088 = vld [vmem:[#allocation14 + $0x4] sm:$0xf]
    %v1089 = vld [vmem:[#allocation14 + $0x8] sm:$0xf]
    %v1090 = vld [vmem:[#allocation14 + $0xc] sm:$0xf]
    %v1091 = vld [vmem:[#allocation14 + $0x10] sm:$0xf]
    %v1092 = vld [vmem:[#allocation14 + $0x14] sm:$0xf]
    %v1093 = vld [vmem:[#allocation14 + $0x18] sm:$0xf]
    %v1094 = vld [vmem:[#allocation14 + $0x1c] sm:$0xf]
    %v1095 = vld [vmem:[#allocation14 + $0x20] sm:$0xf]
    %v1096 = vld [vmem:[#allocation14 + $0x24] sm:$0xf]
    %v1097 = vld [vmem:[#allocation14 + $0x28] sm:$0xf]
    %v1098 = vld [vmem:[#allocation14 + $0x2c] sm:$0xf]
    %v1099 = vld [vmem:[#allocation14 + $0x30] sm:$0xf]
    %v1100 = vld [vmem:[#allocation14 + $0x34] sm:$0xf]
    %v1101 = vld [vmem:[#allocation14 + $0x38] sm:$0xf]
    %v1102 = vld [vmem:[#allocation14 + $0x3c] sm:$0xf]
    %v1103 = vld [vmem:[%s14] sm:$0x1]
    %v1105 = vlaneseq
    %v1106 = vshrl.u32 %v1105, 7
    %v1107 = vsub.s32 0, %v1106
    %v1108 = vrot.slane %v1103, %v1107
    %v1126 = vunpack.c.l.b16 %v1087
    %v1127 = vunpack.c.l.b16 %v1088
    %v1128 = vunpack.c.l.b16 %v1089
    %v1129 = vunpack.c.l.b16 %v1090
    %v1130 = vunpack.c.l.b16 %v1091
    %v1131 = vunpack.c.l.b16 %v1092
    %v1132 = vunpack.c.l.b16 %v1093
    %v1133 = vunpack.c.l.b16 %v1094
    %v1134 = vunpack.c.l.b16 %v1095
    %v1135 = vunpack.c.l.b16 %v1096
    %v1136 = vunpack.c.l.b16 %v1097
    %v1137 = vunpack.c.l.b16 %v1098
    %v1138 = vunpack.c.l.b16 %v1099
    %v1139 = vunpack.c.l.b16 %v1100
    %v1140 = vunpack.c.l.b16 %v1101
    %v1141 = vunpack.c.l.b16 %v1102
    %v1142 = vpack.c.b16 %v1127, %v1126
    %v1143 = vpack.c.b16 %v1129, %v1128
    %v1144 = vpack.c.b16 %v1131, %v1130
    %v1145 = vpack.c.b16 %v1133, %v1132
    %v1146 = vpack.c.b16 %v1135, %v1134
    %v1147 = vpack.c.b16 %v1137, %v1136
    %v1148 = vpack.c.b16 %v1139, %v1138
    %v1149 = vpack.c.b16 %v1141, %v1140
    %1158 = vmatprep.subr.bf16.mxu0 0
    %1159 = vmatpush1.bf16.msra.mxu0 %v1149
    %1160 = vmatprep.subr.bf16.mxu0 0
    %1161 = vmatpush1.bf16.msra.mxu0 %v1148
    %1162 = vmatprep.subr.bf16.mxu0 0
    %1163 = vmatpush1.bf16.msra.mxu0 %v1147
    %1164 = vmatprep.subr.bf16.mxu0 0
    %1165 = vmatpush1.bf16.msra.mxu0 %v1146
    %1166 = vmatprep.subr.bf16.mxu0 0
    %1167 = vmatpush1.bf16.msra.mxu0 %v1145
    %1168 = vmatprep.subr.bf16.mxu0 0
    %1169 = vmatpush1.bf16.msra.mxu0 %v1144
    %1170 = vmatprep.subr.bf16.mxu0 0
    %1171 = vmatpush1.bf16.msra.mxu0 %v1143
    %1172 = vmatprep.subr.bf16.mxu0 0
    %1173 = vmatpush1.bf16.msra.mxu0 %v1142
    %1174 = vmatprep.subr.bf16.mxu0 0
    %1175 = vmatpush2.bf16.msra.mxu0 0
    %1176 = vmatprep.subr.bf16.mxu0 0
    %1177 = vmatpush2.bf16.msra.mxu0 0
    %1178 = vmatprep.subr.bf16.mxu0 0
    %1179 = vmatpush2.bf16.msra.mxu0 0
    %1180 = vmatprep.subr.bf16.mxu0 0
    %1181 = vmatpush2.bf16.msra.mxu0 0
    %1182 = vmatprep.subr.bf16.mxu0 0
    %1183 = vmatpush2.bf16.msra.mxu0 0
    %1184 = vmatprep.subr.bf16.mxu0 0
    %1185 = vmatpush2.bf16.msra.mxu0 0
    %1186 = vmatprep.subr.bf16.mxu0 0
    %1187 = vmatpush2.bf16.msra.mxu0 0
    %1188 = vmatprep.subr.bf16.mxu0 0
    %1189 = vmatpush2.bf16.msra.mxu0 0
    %1190 = vmatprep.mubr.bf16.mxu0 0
    %1191 = vmatmul.mubr.bf16.gmra.mxu0 %v1086
    %v1192 = vpop.f32.mrf.mxu0
    %v1193 = vadd.f32 %v1108, %v1192
    %v1194 = vpop.f32.mrf.mxu0
    %v1195 = vpop.f32.mrf.mxu0
    %v1196 = vpop.f32.mrf.mxu0
    %1197 = vdwg.mxu0
    %1198 = vst [vmem:[#allocation16] sm:$0xff] %v1193
    // Predicated region
    $region94: #{tpu_custom_call.1} parent=1 // pred_check
      _
    $region95: #{tpu_custom_call.1} parent=1 // pred_check_branch
      %1200 = sbr.rel (0) target = $region97
    $region96: #{tpu_custom_call.1} parent=1 // pred_region
      %s1202 = ssub.s32 128, 128
      %1203 = vsyncadd [#allocation4], %s1202
      %s1205 = sshll.u32 [#allocation16], 4
      %s1206 = int_to_ptr.vmem [resolvable:$true] %s1205
      %1208 = dma.vmem_to_hbm [thread:$0]  %s1206, 128, %s15, [#allocation4]
    $region97: #{tpu_custom_call.1} parent=1 // pred_fallthru
      _
    // Predicated region
    $region98: #{tpu_custom_call.1} parent=1 // pred_check
      _
    $region99: #{tpu_custom_call.1} parent=1 // pred_check_branch
      %1210 = sbr.rel (0) target = $region101
    $region100: #{tpu_custom_call.1} parent=1 // pred_region
      %1211 = dma.done [#allocation4], 128
    $region101: #{tpu_custom_call.1} parent=1 // pred_fallthru
      _
    %1212 = vsyncpa [#allocation3], 1
    %1213 = vsyncpa [#allocation6], 1
    %1214 = vsyncpa [#allocation9], 1
    %1215 = vsyncpa [#allocation12], 1
    %1216 = vsyncpa [#allocation15], 1
    %1217 = vsyncpa [#allocation4], 1

</llo_original>
